<compile_context>
chip_gen: v7x
topology: tpu7x:2x2x1
jax: 0.10.0
libtpu: 0.0.40
codegen_flags: <defaults>
</compile_context>

<pallas_src>
import math
from typing import NamedTuple

import jax
import jax.numpy as jnp
from jax.experimental import pallas as pl
from jax.experimental.pallas import tpu as pltpu

_LANE = 128    # lane width: last dim of every tile
_M_UNIT = 16   # bf16 vreg packs [16, 128]; also a multiple of the f32 sublane (8)


def _round_up(x: int, m: int) -> int:
    return ((x + m - 1) // m) * m


def _vmem_capacity_bytes() -> int:
    """Physical VMEM of the local chip; conservative fallback if unqueryable."""
    try:
        return int(pltpu.get_tpu_info().vmem_capacity_bytes)
    except Exception:
        return 64 * 1024 * 1024  # v7x-sized fallback: safe on every generation


def _choose_tiles(B, nn_in, nn_out, *, x_itemsize, w_itemsize, out_itemsize,
                  use_acc_scratch, tm_pref, tn_pref, tk_pref):
    """Pick (tm, tn, tk) that fit the per-chip VMEM budget, and that budget."""
    tm_pref = max(_M_UNIT, (tm_pref // _M_UNIT) * _M_UNIT)
    tn_pref = max(_LANE, (tn_pref // _LANE) * _LANE)
    tk_pref = max(_LANE, (tk_pref // _LANE) * _LANE)

    m_full = _round_up(max(B, 1), _M_UNIT)
    n_full = _round_up(nn_out, _LANE)
    k_full = _round_up(nn_in, _LANE)

    def _clamp(pref, full):
        # Whole (padded) axis in one tile when it fits; else the 256-aligned pref.
        return full if full <= pref else pref

    tm = _clamp(tm_pref, m_full)
    tn = _clamp(tn_pref, n_full)
    tk = _clamp(tk_pref, k_full)

    vmem_phys = _vmem_capacity_bytes()
    # Scoped-VMEM budget: generous on 128 MiB parts (v5e/v6e), ~35 MiB on v7x
    # (64 MiB physical) so double-buffered tiles never spill.
    budget = int(min(0.55 * vmem_phys, 80 * 1024 * 1024))

    def usage(tm_, tn_, tk_):
        return (2 * tm_ * tk_ * x_itemsize          # x, double-buffered
                + 2 * tk_ * tn_ * w_itemsize        # weight, double-buffered
                + 2 * tn_ * 4                       # bias (negligible)
                + 2 * tm_ * tn_ * out_itemsize      # output, double-buffered
                + (tm_ * tn_ * 4 if use_acc_scratch else 0))

    def _halve(t, unit):
        return max(unit, ((t // 2) // unit) * unit)

    while usage(tm, tn, tk) > budget:
        if tk > 512:
            tk = _halve(tk, _LANE)          # shrinking K doesn't add re-reads
        elif tn >= tm and tn > 256:
            tn = _halve(tn, _LANE)
        elif tm > 256:
            tm = _halve(tm, _M_UNIT)
        elif tn > _LANE:
            tn = _halve(tn, _LANE)
        elif tk > _LANE:
            tk = _halve(tk, _LANE)
        elif tm > _M_UNIT:
            tm = _halve(tm, _M_UNIT)
        else:
            break

    return tm, tn, tk, budget


# ---------------------------------------------------------------------------
# Kernels
# ---------------------------------------------------------------------------
def _fc_kernel_acc(x_ref, w_ref, b_ref, o_ref, acc_ref):
    """Narrow-output path: f32 accumulation in a VMEM scratch tile.

    x_ref:   (tm, tk)  activation tile (any dtype; cast per-tile below)
    w_ref:   (tk, tn)  pre-transposed, pre-cast weight tile (K, N layout)
    b_ref:   (1,  tn)  f32 bias tile
    o_ref:   (tm, tn)  output tile
    acc_ref: (tm, tn)  f32 accumulator (persists across the K grid axis)
    """
    k = pl.program_id(2)

    @pl.when(k == 0)
    def _():
        acc_ref[...] = jnp.zeros_like(acc_ref)

    acc_ref[...] += jnp.dot(x_ref[...].astype(w_ref.dtype), w_ref[...],
                            preferred_element_type=jnp.float32)

    @pl.when(k == pl.num_programs(2) - 1)
    def _():
        o_ref[...] = (acc_ref[...] + b_ref[...]).astype(o_ref.dtype)


def _fc_kernel_f32out(x_ref, w_ref, b_ref, o_ref):
    """float32-output path: accumulate directly into the resident output tile
    (its block index ignores k, so it stays in VMEM across the K axis)."""
    k = pl.program_id(2)

    @pl.when(k == 0)
    def _():
        o_ref[...] = jnp.zeros_like(o_ref)

    o_ref[...] += jnp.dot(x_ref[...].astype(w_ref.dtype), w_ref[...],
                          preferred_element_type=jnp.float32)

    @pl.when(k == pl.num_programs(2) - 1)
    def _():
        o_ref[...] += b_ref[...]


# ---------------------------------------------------------------------------
# Wrapper
# ---------------------------------------------------------------------------
class FCParams(NamedTuple):
    w_kn: jax.Array       # (k_pad, n_pad) compute dtype, transposed + padded once
    b_1n: jax.Array       # (1, n_pad) float32, padded once
    nn_in: int
    nn_out: int
    tm_pref: int
    tn: int
    tk: int
    vmem_limit: int


def prepare_fc_params(weight, bias, *, compute_dtype=jnp.bfloat16,
                      tm_pref=512, tn_pref=2048, tk_pref=2048) -> FCParams:
    """One-time (amortized) weight/bias preparation -- keeps the per-call
    forward path free of any full-weight cast/transpose/pad HBM passes."""
    nn_out, nn_in = weight.shape
    tm, tn, tk, budget = _choose_tiles(
        B=tm_pref, nn_in=nn_in, nn_out=nn_out,
        x_itemsize=4,                                       # conservative: f32 x
        w_itemsize=jnp.dtype(compute_dtype).itemsize,
        out_itemsize=4,
        use_acc_scratch=True,
        tm_pref=tm_pref, tn_pref=tn_pref, tk_pref=tk_pref)

    k_pad = _round_up(nn_in, tk)
    n_pad = _round_up(nn_out, tn)

    w_kn = jnp.pad(weight.astype(compute_dtype).T,          # (nn_in, nn_out)
                   ((0, k_pad - nn_in), (0, n_pad - nn_out)))
    b_1n = jnp.pad(bias.astype(jnp.float32).reshape(1, nn_out),
                   ((0, 0), (0, n_pad - nn_out)))
    return FCParams(w_kn, b_1n, nn_in, nn_out, tm, tn, tk, budget)


def fc_forward(params: FCParams, x):
    """y = x @ weight.T + bias  (PyTorch nn.Linear semantics), x: (..., nn_in)."""
    *lead, d = x.shape
    assert d == params.nn_in, (d, params.nn_in)
    out_dtype = x.dtype
    compute_dtype = params.w_kn.dtype

    x2d = x.reshape(-1, d)
    B = x2d.shape[0]
    tn, tk = params.tn, params.tk
    k_pad, n_pad = params.w_kn.shape

    # M tile: clamp the prepared preference to the actual batch.
    tm = min(params.tm_pref, _round_up(B, _M_UNIT))
    tm = max(_M_UNIT, (tm // _M_UNIT) * _M_UNIT)
    m_pad = _round_up(B, tm)

    # Keep >= 2 parallel grid steps when tiles are large so v7x's two
    # TensorCores both get work (no-op for small problems / 1-TC chips).
    if (m_pad // tm) * (n_pad // tn) == 1 and tm >= 512:
        tm //= 2
        m_pad = _round_up(B, tm)

    grid = (m_pad // tm, n_pad // tn, k_pad // tk)

    # Activation dtype: cast per-tile inside the kernel (VALU work hidden under
    # the MXU, saves a full HBM pre-pass) unless x is re-streamed across many
    # N tiles, in which case a one-off pre-cast halves the repeated reads.
    if x2d.dtype != compute_dtype and grid[1] > 2:
        x_in = x2d.astype(compute_dtype)
    else:
        x_in = x2d
    if (m_pad, k_pad) != (B, d):
        # Zero-pad: padded K contributes nothing to the dot (weight also padded).
        x_in = jnp.pad(x_in, ((0, m_pad - B), (0, k_pad - d)))

    use_scratch = out_dtype != jnp.float32
    kernel = _fc_kernel_acc if use_scratch else _fc_kernel_f32out
    scratch = [pltpu.VMEM((tm, tn), jnp.float32)] if use_scratch else []

    x_item = jnp.dtype(x_in.dtype).itemsize
    w_item = jnp.dtype(compute_dtype).itemsize
    out_item = jnp.dtype(out_dtype).itemsize
    cost = pl.CostEstimate(
        flops=2 * m_pad * n_pad * k_pad,
        transcendentals=0,
        bytes_accessed=(m_pad * k_pad * x_item * grid[1]      # x re-read per N tile
                        + k_pad * n_pad * w_item * grid[0]    # w re-read per M tile
                        + n_pad * 4
                        + m_pad * n_pad * out_item),
    )

    out = pl.pallas_call(
        kernel,
        out_shape=jax.ShapeDtypeStruct((m_pad, n_pad), out_dtype),
        grid_spec=pltpu.PrefetchScalarGridSpec(
            num_scalar_prefetch=0,
            grid=grid,
            in_specs=[
                pl.BlockSpec((tm, tk), lambda i, j, k: (i, k)),   # x
                pl.BlockSpec((tk, tn), lambda i, j, k: (k, j)),   # weight (K, N)
                pl.BlockSpec((1, tn), lambda i, j, k: (0, j)),    # bias
            ],
            out_specs=pl.BlockSpec((tm, tn), lambda i, j, k: (i, j)),
            scratch_shapes=scratch,
        ),
        compiler_params=pltpu.CompilerParams(
            dimension_semantics=("parallel", "parallel", "arbitrary"),
            vmem_limit_bytes=int(params.vmem_limit),
        ),
        cost_estimate=cost,
    )(x_in, params.w_kn, params.b_1n)

    out = out[:B, :params.nn_out]
    return out.reshape(*lead, params.nn_out)


class FC:
    """Pallas TPU port of the PyTorch FC module (a single nn.Linear)."""

    def __init__(self, nn_in, nn_out, *, key, compute_dtype=jnp.bfloat16,
                 tm_pref=512, tn_pref=2048, tk_pref=2048):
        k_w, k_b = jax.random.split(key)
        bound = 1.0 / math.sqrt(nn_in)   # PyTorch nn.Linear default init
        self.weight = jax.random.uniform(k_w, (nn_out, nn_in), jnp.float32,
                                         -bound, bound)
        self.bias = jax.random.uniform(k_b, (nn_out,), jnp.float32, -bound, bound)
        # Weight cast/transpose/pad happens exactly once, here.
        self.params = prepare_fc_params(self.weight, self.bias,
                                        compute_dtype=compute_dtype,
                                        tm_pref=tm_pref, tn_pref=tn_pref,
                                        tk_pref=tk_pref)

    def __call__(self, x):
        return fc_forward(self.params, x)


if __name__ == "__main__":
    key = jax.random.PRNGKey(0)
    k_mod, k_mod2, k_x1, k_x2 = jax.random.split(key, 4)

    # --- case 1: small f32 activations (f32-output kernel, in-kernel bf16
    #             cast, M/N/K padding, single-tile grid) ---------------------
    nn_in, nn_out = 32, 16
    fc = FC(nn_in, nn_out, key=k_mod)
    x = jax.random.normal(k_x1, (2, 8, nn_in), jnp.float32)
    y = fc(x)
    jax.block_until_ready(y)
    assert y.shape == (2, 8, nn_out) and y.dtype == x.dtype
    y_ref = x @ fc.weight.T + fc.bias
    assert jnp.allclose(y, y_ref, atol=5e-2, rtol=5e-2), (
        float(jnp.max(jnp.abs(y - y_ref))))

    # --- case 2: bf16 activations, non-aligned shapes, multi-tile N and K
    #             grid (f32-scratch accumulator path, pl.when init/epilogue) --
    nn_in2, nn_out2 = 384, 272
    fc2 = FC(nn_in2, nn_out2, key=k_mod2, tn_pref=128, tk_pref=256)
    x2 = jax.random.normal(k_x2, (3, 10, nn_in2), jnp.float32).astype(jnp.bfloat16)
    y2 = fc2(x2)
    jax.block_until_ready(y2)
    assert y2.shape == (3, 10, nn_out2) and y2.dtype == x2.dtype
    w2_bf = fc2.weight.astype(jnp.bfloat16).astype(jnp.float32)
    y2_ref = x2.astype(jnp.float32) @ w2_bf.T + fc2.bias
    assert jnp.allclose(y2.astype(jnp.float32), y2_ref, atol=5e-2, rtol=5e-2), (
        float(jnp.max(jnp.abs(y2.astype(jnp.float32) - y2_ref))))

    print("KERNEL_OK")
</pallas_src>

<mosaic_0001>
module attributes {stable_mosaic.version = 11 : i64} {
  func.func @_fc_kernel_f32out(%arg0: i32, %arg1: i32, %arg2: i32, %arg3: memref<16x128xf32, #tpu.memory_space<vmem>>, %arg4: memref<128x128xbf16, #tpu.memory_space<vmem>>, %arg5: memref<1x128xf32, #tpu.memory_space<vmem>>, %arg6: memref<16x128xf32, #tpu.memory_space<vmem>>) attributes {dimension_semantics = [#tpu.dimension_semantics<parallel>, #tpu.dimension_semantics<parallel>, #tpu.dimension_semantics<arbitrary>], iteration_bounds = array<i64: 1, 1, 1>, scalar_prefetch = 0 : i64, scratch_operands = 0 : i64, tpu.core_type = #tpu.core_type<tc>, window_params = [{transform_indices = @transform_0, window_bounds = array<i64: 16, 128>}, {transform_indices = @transform_1, window_bounds = array<i64: 128, 128>}, {transform_indices = @transform_2, window_bounds = array<i64: 1, 128>}, {transform_indices = @transform_3, window_bounds = array<i64: 16, 128>}]} {
    %c0_i32 = arith.constant 0 : i32
    %0 = arith.cmpi eq, %arg2, %c0_i32 : i32
    %1 = arith.extui %0 : i1 to i32
    %c0_i32_0 = arith.constant 0 : i32
    %2 = arith.cmpi ne, %1, %c0_i32_0 : i32
    scf.if %2 {
      %cst_10 = arith.constant 0.000000e+00 : f32
      %13 = vector.broadcast %cst_10 : f32 to vector<16x128xf32>
      %c0_11 = arith.constant 0 : index
      %c0_12 = arith.constant 0 : index
      %14 = vector.load %arg6[%c0_11, %c0_12] : memref<16x128xf32, #tpu.memory_space<vmem>>, vector<16x128xf32>
      tpu.vector_store %arg6[%c0_11, %c0_12], %13 {strides = array<i32>} : memref<16x128xf32, #tpu.memory_space<vmem>>, vector<16x128xf32>,
    } else {
    }
    %c0 = arith.constant 0 : index
    %c0_1 = arith.constant 0 : index
    %3 = vector.load %arg6[%c0, %c0_1] : memref<16x128xf32, #tpu.memory_space<vmem>>, vector<16x128xf32>
    %c0_2 = arith.constant 0 : index
    %c0_3 = arith.constant 0 : index
    %4 = vector.load %arg3[%c0_2, %c0_3] : memref<16x128xf32, #tpu.memory_space<vmem>>, vector<16x128xf32>
    %5 = arith.truncf %4 : vector<16x128xf32> to vector<16x128xbf16>
    %c0_4 = arith.constant 0 : index
    %c0_5 = arith.constant 0 : index
    %6 = vector.load %arg4[%c0_4, %c0_5] : memref<128x128xbf16, #tpu.memory_space<vmem>>, vector<128x128xbf16>
    %cst = arith.constant dense<0.000000e+00> : vector<16x128xf32>
    %7 = tpu.matmul %5, %6, %cst {dimension_numbers = #tpu.dot_dimension_numbers<[1], [0], [0], [1], [0, 0, 1, 1], [], []>} : vector<16x128xbf16>, vector<128x128xbf16>, vector<16x128xf32> -> vector<16x128xf32>
    %8 = arith.addf %3, %7 : vector<16x128xf32>
    %c0_6 = arith.constant 0 : index
    %c0_7 = arith.constant 0 : index
    %9 = vector.load %arg6[%c0_6, %c0_7] : memref<16x128xf32, #tpu.memory_space<vmem>>, vector<16x128xf32>
    tpu.vector_store %arg6[%c0_6, %c0_7], %8 {strides = array<i32>} : memref<16x128xf32, #tpu.memory_space<vmem>>, vector<16x128xf32>,
    %c0_i32_8 = arith.constant 0 : i32
    %10 = arith.cmpi eq, %arg2, %c0_i32_8 : i32
    %11 = arith.extui %10 : i1 to i32
    %c0_i32_9 = arith.constant 0 : i32
    %12 = arith.cmpi ne, %11, %c0_i32_9 : i32
    scf.if %12 {
      %c0_10 = arith.constant 0 : index
      %c0_11 = arith.constant 0 : index
      %13 = vector.load %arg6[%c0_10, %c0_11] : memref<16x128xf32, #tpu.memory_space<vmem>>, vector<16x128xf32>
      %c0_12 = arith.constant 0 : index
      %c0_13 = arith.constant 0 : index
      %14 = vector.load %arg5[%c0_12, %c0_13] : memref<1x128xf32, #tpu.memory_space<vmem>>, vector<1x128xf32>
      %15 = vector.broadcast %14 : vector<1x128xf32> to vector<16x128xf32>
      %16 = arith.addf %13, %15 : vector<16x128xf32>
      %c0_14 = arith.constant 0 : index
      %c0_15 = arith.constant 0 : index
      %17 = vector.load %arg6[%c0_14, %c0_15] : memref<16x128xf32, #tpu.memory_space<vmem>>, vector<16x128xf32>
      tpu.vector_store %arg6[%c0_14, %c0_15], %16 {strides = array<i32>} : memref<16x128xf32, #tpu.memory_space<vmem>>, vector<16x128xf32>,
    } else {
    }
    return
  }
  func.func @transform_0(%arg0: i32, %arg1: i32, %arg2: i32) -> (i32, i32) {
    %c0_i32 = arith.constant 0 : i32
    return %arg0, %arg2 : i32, i32
  }
  func.func @transform_1(%arg0: i32, %arg1: i32, %arg2: i32) -> (i32, i32) {
    %c0_i32 = arith.constant 0 : i32
    return %arg2, %arg1 : i32, i32
  }
  func.func @transform_2(%arg0: i32, %arg1: i32, %arg2: i32) -> (i32, i32) {
    %c0_i32 = arith.constant 0 : i32
    %c0_i32_0 = arith.constant 0 : i32
    return %c0_i32, %arg1 : i32, i32
  }
  func.func @transform_3(%arg0: i32, %arg1: i32, %arg2: i32) -> (i32, i32) {
    %c0_i32 = arith.constant 0 : i32
    return %arg0, %arg1 : i32, i32
  }
}

</mosaic_0001>

<llo_original>
// kernel: tpu_custom_call.1
$region0: #{tpu_custom_call.1}
  #allocation0 [shape = 'u32[]', space=smem, size = 0x4, offset = 0x4, fixed_abs, tag = 'smem constant byte address 0x4 - core index']
  #allocation1 [shape = 'u32[144,128]{1,0:T(1,128)}', space=vmem, size = 0x12000, scoped, tag = 'internal scratch']
  %s0 = inlined_call_operand.hbm [shape: f32[16,128], index: 0, kind: input, shape index: {}]
  %s1 = inlined_call_operand.hbm [shape: bf16[128,128], index: 1, kind: input, shape index: {}]
  %s2 = inlined_call_operand.vmem [shape: f32[1,128], index: 2, kind: input, shape index: {}]
  %s3 = inlined_call_operand.hbm [shape: f32[16,128], index: 3, kind: output, shape index: {}]
  %s4 = sld [smem:[#allocation0]]
  $region38: #{tpu_custom_call.1} parent=0
    _
  %s6 = ssub.s32 1, %s4
  %s7 = scalar_select 0, %s6, %s4
  $region1: #{tpu_custom_call.1} parent=0
    #allocation2 [shape = 'u8[8192]{0}', space=vmem, size = 0x2000, scoped, tag = 'input window, operand 0, single buffered']
    #allocation3 [shape = 's32[1]{0}', space=sflag, size = 0x4, scoped, tag = 'scoped memory for tpu_custom_call.1']
    #allocation4 [shape = 's32[1]{0}', space=sflag, size = 0x4, scoped, tag = 'scoped memory for tpu_custom_call.1']
    #allocation5 [shape = 'u8[32768]{0}', space=vmem, size = 0x8000, scoped, tag = 'input window, operand 1, single buffered']
    #allocation6 [shape = 's32[1]{0}', space=sflag, size = 0x4, scoped, tag = 'scoped memory for tpu_custom_call.1']
    #allocation7 [shape = 'u8[8192]{0}', space=vmem, size = 0x2000, scoped, tag = 'output window, operand 0, single buffered']
    %8 = vsyncpa [#allocation3], 0
    %9 = vsyncpa [#allocation6], 0
    %10 = vsyncpa [#allocation4], 0
    // Predicated region
    $region2: #{tpu_custom_call.1} parent=1 // pred_check
      _
    $region3: #{tpu_custom_call.1} parent=1 // pred_check_branch
      %12 = sbr.rel (0) target = $region5
    $region4: #{tpu_custom_call.1} parent=1 // pred_region
      %s14 = ssub.s32 256, 256
      %15 = vsyncadd [#allocation3], %s14
      %s16 = sshll.u32 [#allocation2], 4
      %s17 = int_to_ptr.vmem [resolvable:$true] %s16
      %22 = dma.hbm_to_vmem [thread:$0]  %s0, 256, %s17, [#allocation3], 128, 128, 8
    $region5: #{tpu_custom_call.1} parent=1 // pred_fallthru
      _
    // Predicated region
    $region6: #{tpu_custom_call.1} parent=1 // pred_check
      _
    $region7: #{tpu_custom_call.1} parent=1 // pred_check_branch
      %24 = sbr.rel (0) target = $region9
    $region8: #{tpu_custom_call.1} parent=1 // pred_region
      %s26 = ssub.s32 1024, 1024
      %27 = vsyncadd [#allocation6], %s26
      %s28 = sshll.u32 [#allocation5], 4
      %s29 = int_to_ptr.vmem [resolvable:$true] %s28
      %34 = dma.hbm_to_vmem [thread:$0]  %s1, 1024, %s29, [#allocation6], 64, 64, 4
    $region9: #{tpu_custom_call.1} parent=1 // pred_fallthru
      _
    // Predicated region
    $region10: #{tpu_custom_call.1} parent=1 // pred_check
      _
    $region11: #{tpu_custom_call.1} parent=1 // pred_check_branch
      %36 = sbr.rel (0) target = $region13
    $region12: #{tpu_custom_call.1} parent=1 // pred_region
      _
    $region13: #{tpu_custom_call.1} parent=1 // pred_fallthru
      _
    // Predicated region
    $region14: #{tpu_custom_call.1} parent=1 // pred_check
      _
    $region15: #{tpu_custom_call.1} parent=1 // pred_check_branch
      %38 = sbr.rel (0) target = $region17
    $region16: #{tpu_custom_call.1} parent=1 // pred_region
      %39 = dma.done [#allocation3], 256
    $region17: #{tpu_custom_call.1} parent=1 // pred_fallthru
      _
    // Predicated region
    $region18: #{tpu_custom_call.1} parent=1 // pred_check
      _
    $region19: #{tpu_custom_call.1} parent=1 // pred_check_branch
      %41 = sbr.rel (0) target = $region21
    $region20: #{tpu_custom_call.1} parent=1 // pred_region
      %42 = dma.done [#allocation6], 1024
    $region21: #{tpu_custom_call.1} parent=1 // pred_fallthru
      _
    %p44 = scmp.eq.s32.totalorder 0, 0
    // Predicated region
    $region22: #{tpu_custom_call.1} parent=1 // pred_check
      %p45 = pneg %p44
    $region23: #{tpu_custom_call.1} parent=1 // pred_check_branch
      %47 = sbr.rel (%p45) target = $region25
    $region24: #{tpu_custom_call.1} parent=1 // pred_region
      %48 = vst [vmem:[#allocation7] sm:$0xff] 0.0
      %49 = vst [vmem:[#allocation7 + $0x8] sm:$0xff] 0.0
    $region25: #{tpu_custom_call.1} parent=1 // pred_fallthru
      _
    %v50 = vld [vmem:[#allocation7] sm:$0xff]
    %v51 = vld [vmem:[#allocation7 + $0x8] sm:$0xff]
    %v52 = vld [vmem:[#allocation2] sm:$0xff]
    %v53 = vld [vmem:[#allocation2 + $0x8] sm:$0xff]
    %v54 = vpack.c.bf16 %v53, %v52
    %v55 = vld [vmem:[#allocation5] sm:$0xf]
    %v56 = vld [vmem:[#allocation5 + $0x4] sm:$0xf]
    %v57 = vld [vmem:[#allocation5 + $0x8] sm:$0xf]
    %v58 = vld [vmem:[#allocation5 + $0xc] sm:$0xf]
    %v59 = vld [vmem:[#allocation5 + $0x10] sm:$0xf]
    %v60 = vld [vmem:[#allocation5 + $0x14] sm:$0xf]
    %v61 = vld [vmem:[#allocation5 + $0x18] sm:$0xf]
    %v62 = vld [vmem:[#allocation5 + $0x1c] sm:$0xf]
    %v63 = vld [vmem:[#allocation5 + $0x20] sm:$0xf]
    %v64 = vld [vmem:[#allocation5 + $0x24] sm:$0xf]
    %v65 = vld [vmem:[#allocation5 + $0x28] sm:$0xf]
    %v66 = vld [vmem:[#allocation5 + $0x2c] sm:$0xf]
    %v67 = vld [vmem:[#allocation5 + $0x30] sm:$0xf]
    %v68 = vld [vmem:[#allocation5 + $0x34] sm:$0xf]
    %v69 = vld [vmem:[#allocation5 + $0x38] sm:$0xf]
    %v70 = vld [vmem:[#allocation5 + $0x3c] sm:$0xf]
    %v87 = vunpack.c.l.b16 %v55
    %v88 = vunpack.c.l.b16 %v56
    %v89 = vunpack.c.l.b16 %v57
    %v90 = vunpack.c.l.b16 %v58
    %v91 = vunpack.c.l.b16 %v59
    %v92 = vunpack.c.l.b16 %v60
    %v93 = vunpack.c.l.b16 %v61
    %v94 = vunpack.c.l.b16 %v62
    %v95 = vunpack.c.l.b16 %v63
    %v96 = vunpack.c.l.b16 %v64
    %v97 = vunpack.c.l.b16 %v65
    %v98 = vunpack.c.l.b16 %v66
    %v99 = vunpack.c.l.b16 %v67
    %v100 = vunpack.c.l.b16 %v68
    %v101 = vunpack.c.l.b16 %v69
    %v102 = vunpack.c.l.b16 %v70
    %v103 = vpack.c.b16 %v88, %v87
    %v104 = vpack.c.b16 %v90, %v89
    %v105 = vpack.c.b16 %v92, %v91
    %v106 = vpack.c.b16 %v94, %v93
    %v107 = vpack.c.b16 %v96, %v95
    %v108 = vpack.c.b16 %v98, %v97
    %v109 = vpack.c.b16 %v100, %v99
    %v110 = vpack.c.b16 %v102, %v101
    %119 = vmatprep.subr.bf16.mxu0 0
    %120 = vmatpush1.bf16.msra.mxu0 %v103
    %121 = vmatprep.subr.bf16.mxu0 0
    %122 = vmatpush1.bf16.msra.mxu0 %v104
    %123 = vmatprep.subr.bf16.mxu0 0
    %124 = vmatpush1.bf16.msra.mxu0 %v105
    %125 = vmatprep.subr.bf16.mxu0 0
    %126 = vmatpush1.bf16.msra.mxu0 %v106
    %127 = vmatprep.subr.bf16.mxu0 0
    %128 = vmatpush1.bf16.msra.mxu0 %v107
    %129 = vmatprep.subr.bf16.mxu0 0
    %130 = vmatpush1.bf16.msra.mxu0 %v108
    %131 = vmatprep.subr.bf16.mxu0 0
    %132 = vmatpush1.bf16.msra.mxu0 %v109
    %133 = vmatprep.subr.bf16.mxu0 0
    %134 = vmatpush1.bf16.msra.mxu0 %v110
    %135 = vmatprep.subr.bf16.mxu0 0
    %136 = vmatpush1.bf16.msra.mxu0 0
    %137 = vmatprep.subr.bf16.mxu0 0
    %138 = vmatpush1.bf16.msra.mxu0 0
    %139 = vmatprep.subr.bf16.mxu0 0
    %140 = vmatpush1.bf16.msra.mxu0 0
    %141 = vmatprep.subr.bf16.mxu0 0
    %142 = vmatpush1.bf16.msra.mxu0 0
    %143 = vmatprep.subr.bf16.mxu0 0
    %144 = vmatpush1.bf16.msra.mxu0 0
    %145 = vmatprep.subr.bf16.mxu0 0
    %146 = vmatpush1.bf16.msra.mxu0 0
    %147 = vmatprep.subr.bf16.mxu0 0
    %148 = vmatpush1.bf16.msra.mxu0 0
    %149 = vmatprep.subr.bf16.mxu0 0
    %150 = vmatpush1.bf16.msra.mxu0 0
    %151 = vmatprep.mubr.bf16.mxu0 0
    %152 = vmatmul.mubr.bf16.gmra.mrb[0].mxu0 %v54
    %v153 = vpop.f32.mrb[0].mxu0
    %v154 = vadd.f32 0.0, %v153
    %v155 = vpop.f32.mrb[0].mxu0
    %v156 = vpop.f32.mrb[0].mxu0
    %v157 = vadd.f32 0.0, %v156
    %v158 = vpop.f32.mrb[0].mxu0
    %159 = vdwg.mxu0
    %v160 = vadd.f32 %v50, %v154
    %v161 = vadd.f32 %v51, %v157
    %162 = vst [vmem:[#allocation7] sm:$0xff] %v160
    %163 = vst [vmem:[#allocation7 + $0x8] sm:$0xff] %v161
    // Predicated region
    $region26: #{tpu_custom_call.1} parent=1 // pred_check
      %p164 = pneg %p44
    $region27: #{tpu_custom_call.1} parent=1 // pred_check_branch
      %166 = sbr.rel (%p164) target = $region29
    $region28: #{tpu_custom_call.1} parent=1 // pred_region
      %v167 = vld [vmem:[#allocation7] sm:$0xff]
      %v168 = vld [vmem:[#allocation7 + $0x8] sm:$0xff]
      %v169 = vld [vmem:[%s2] sm:$0x1]
      %v171 = vlaneseq
      %v172 = vshrl.u32 %v171, 7
      %v173 = vsub.s32 0, %v172
      %v174 = vrot.slane %v169, %v173
      %v176 = vadd.f32 %v167, %v174
      %v177 = vadd.f32 %v168, %v174
      %178 = vst [vmem:[#allocation7] sm:$0xff] %v176
      %179 = vst [vmem:[#allocation7 + $0x8] sm:$0xff] %v177
    $region29: #{tpu_custom_call.1} parent=1 // pred_fallthru
      _
    // Predicated region
    $region30: #{tpu_custom_call.1} parent=1 // pred_check
      _
    $region31: #{tpu_custom_call.1} parent=1 // pred_check_branch
      %181 = sbr.rel (0) target = $region33
    $region32: #{tpu_custom_call.1} parent=1 // pred_region
      %s183 = ssub.s32 256, 256
      %184 = vsyncadd [#allocation4], %s183
      %s185 = sshll.u32 [#allocation7], 4
      %s186 = int_to_ptr.vmem [resolvable:$true] %s185
      %191 = dma.vmem_to_hbm [thread:$0]  %s186, 256, %s3, [#allocation4], 128, 128, 8
    $region33: #{tpu_custom_call.1} parent=1 // pred_fallthru
      _
    // Predicated region
    $region34: #{tpu_custom_call.1} parent=1 // pred_check
      _
    $region35: #{tpu_custom_call.1} parent=1 // pred_check_branch
      %193 = sbr.rel (0) target = $region37
    $region36: #{tpu_custom_call.1} parent=1 // pred_region
      %194 = dma.done [#allocation4], 256
    $region37: #{tpu_custom_call.1} parent=1 // pred_fallthru
      _
    %195 = vsyncpa [#allocation3], 1
    %196 = vsyncpa [#allocation6], 1
    %197 = vsyncpa [#allocation4], 1

</llo_original>
